<compile_context>
chip_gen: v7x
topology: tpu7x:2x2x1
jax: 0.10.0
libtpu: 0.0.40
codegen_flags: <defaults>
</compile_context>

<pallas_src>
import jax
import jax.numpy as jnp
from jax.experimental import pallas as pl
from jax.experimental.pallas import tpu as pltpu


def _round_up(x, m):
    return ((x + m - 1) // m) * m


def _rel_head_kernel(x_ref, w1_ref, b1_ref, w2_ref, b2_ref, out_ref, acc_ref):
    # x: (TM, Kp) bf16, w1: (Kp, TH) bf16, b1: (1, TH) f32,
    # w2: (TH, Lp) bf16, b2: (1, Lp) f32, out: (TM, Lp) f32, acc: (TM, Lp) f32
    h_idx = pl.program_id(1)

    @pl.when(h_idx == 0)
    def _():
        acc_ref[...] = jnp.zeros_like(acc_ref)

    # dense: bf16 MXU inputs, f32 accumulation; bias + ReLU in f32.
    h = jnp.dot(x_ref[...], w1_ref[...], preferred_element_type=jnp.float32)
    h = jnp.maximum(h + b1_ref[...], 0.0)

    # classifier: accumulate partial products over the tiled hidden (H) axis.
    acc_ref[...] += jnp.dot(h.astype(w2_ref.dtype), w2_ref[...],
                            preferred_element_type=jnp.float32)

    @pl.when(h_idx == pl.num_programs(1) - 1)
    def _():
        out_ref[...] = acc_ref[...] + b2_ref[...]


def prepare_relation_head_params(params, compute_dtype=jnp.bfloat16):
    """Pad weights to lane-dense (8,128)-aligned shapes and cast to bf16 ONCE.

    Call this at parameter-load time, not per forward call.
    """
    Kd, Hd = params["w1"].shape            # Kd = 2 * bert_dim
    _, L = params["w2"].shape
    Kp = _round_up(Kd, 128)
    Hp = _round_up(Hd, 128)
    Lp = _round_up(L, 128)
    return {
        "w1": jnp.pad(params["w1"], ((0, Kp - Kd), (0, Hp - Hd))).astype(compute_dtype),
        "b1": jnp.pad(params["b1"], ((0, 0), (0, Hp - Hd))).astype(jnp.float32),
        "w2": jnp.pad(params["w2"], ((0, Hp - Hd), (0, Lp - L))).astype(compute_dtype),
        "b2": jnp.pad(params["b2"], ((0, 0), (0, Lp - L))).astype(jnp.float32),
        "dims": (Kd, Hd, L),
    }


def relation_extraction_forward(input_ids, hidden, prepared, e1_id, e2_id):
    """input_ids: (B, S) int32; hidden: (B, S, D) f32 (BERT last_hidden_state)."""
    B, S, D = hidden.shape
    Kd, Hd, L = prepared["dims"]
    assert Kd == 2 * D
    w1_p, b1_p, w2_p, b2_p = prepared["w1"], prepared["b1"], prepared["w2"], prepared["b2"]
    Kp, Hp = w1_p.shape
    Lp = w2_p.shape[1]

    # First occurrence of each marker.  argmax over an all-False row returns 0,
    # which exactly matches the PyTorch fallback (e*_pos = [0]).
    pos1 = jnp.argmax(input_ids == e1_id, axis=1)
    pos2 = jnp.argmax(input_ids == e2_id, axis=1)

    # Gather marker hidden vectors in the wrapper: only 2*D per example ever
    # reaches the kernel (never the whole (B, S, D) tensor).
    ent1 = jnp.take_along_axis(hidden, pos1[:, None, None], axis=1)[:, 0, :]
    ent2 = jnp.take_along_axis(hidden, pos2[:, None, None], axis=1)[:, 0, :]
    x = jnp.concatenate([ent1, ent2], axis=1).astype(w1_p.dtype)   # dropout == identity

    # Batch tiling: MXU-matched granules when B is large, minimal padding when small.
    Bp = _round_up(B, 8)
    if Bp >= 256:
        TM = 256
        Bp = _round_up(Bp, TM)
    elif Bp >= 128:
        TM = 128
        Bp = _round_up(Bp, TM)
    else:
        TM = Bp
    # Hidden-dim (reduction) tiling for the second matmul.
    TH = 512 if Hp % 512 == 0 else (256 if Hp % 256 == 0 else 128)

    # Cheap pad (no scatter-into-zeros); zero padding is inert through the head.
    x_p = jnp.pad(x, ((0, Bp - B), (0, Kp - Kd)))

    grid = (Bp // TM, Hp // TH)
    out_p = pl.pallas_call(
        _rel_head_kernel,
        out_shape=jax.ShapeDtypeStruct((Bp, Lp), jnp.float32),
        grid_spec=pltpu.PrefetchScalarGridSpec(
            num_scalar_prefetch=0,
            grid=grid,
            in_specs=[
                pl.BlockSpec((TM, Kp), lambda i, h: (i, 0)),   # activations
                pl.BlockSpec((Kp, TH), lambda i, h: (0, h)),   # w1 column tile
                pl.BlockSpec((1, TH), lambda i, h: (0, h)),    # b1 tile
                pl.BlockSpec((TH, Lp), lambda i, h: (h, 0)),   # w2 row tile
                pl.BlockSpec((1, Lp), lambda i, h: (0, 0)),    # b2
            ],
            out_specs=pl.BlockSpec((TM, Lp), lambda i, h: (i, 0)),
            scratch_shapes=[pltpu.VMEM((TM, Lp), jnp.float32)],
        ),
        compiler_params=pltpu.CompilerParams(
            dimension_semantics=("parallel", "arbitrary")),
    )(x_p, w1_p, b1_p, w2_p, b2_p)

    return out_p[:B, :L]


if __name__ == "__main__":
    # Small, deterministic configuration.
    B, S, D = 2, 8, 32          # batch, seq_len, bert hidden size
    HIDDEN_DIM = 32
    NUM_LABELS = 4
    VOCAB = 64
    E1_ID, E2_ID = 60, 61       # ids of the '[E1]' / '[E2]' marker tokens

    key = jax.random.PRNGKey(0)
    k_emb, k_ids, k_w1, k_b1, k_w2, k_b2 = jax.random.split(key, 6)

    # TODO(synk): the pretrained AutoModel BERT backbone has no in-script
    # equivalent; a deterministic embedding table stands in for last_hidden_state.
    embedding = jax.random.normal(k_emb, (VOCAB, D), dtype=jnp.float32)

    # Build input_ids and plant the entity markers ([E2] missing in sample 1 to
    # exercise the "fallback to position 0" branch).
    input_ids = jax.random.randint(k_ids, (B, S), 0, 40, dtype=jnp.int32)
    input_ids = input_ids.at[0, 2].set(E1_ID).at[0, 5].set(E2_ID)
    input_ids = input_ids.at[1, 4].set(E1_ID)  # no [E2] in example 1

    # Synthetic "BERT" output (plain-JAX glue).
    hidden = embedding[input_ids]              # (B, S, D) float32

    # Head parameters (nn.Linear shapes, stored transposed for x @ W).
    params = {
        "w1": jax.random.normal(k_w1, (2 * D, HIDDEN_DIM), dtype=jnp.float32) * 0.05,
        "b1": jax.random.normal(k_b1, (1, HIDDEN_DIM), dtype=jnp.float32) * 0.05,
        "w2": jax.random.normal(k_w2, (HIDDEN_DIM, NUM_LABELS), dtype=jnp.float32) * 0.05,
        "b2": jax.random.normal(k_b2, (1, NUM_LABELS), dtype=jnp.float32) * 0.05,
    }

    # Pad + cast weights ONCE (out of the hot path).
    prepared = prepare_relation_head_params(params)

    logits = relation_extraction_forward(input_ids, hidden, prepared, E1_ID, E2_ID)
    logits = jax.block_until_ready(logits)

    # Pure-JAX f32 reference for sanity checking the kernel semantics.
    pos1 = jnp.argmax((input_ids == E1_ID).astype(jnp.int32), axis=1)
    pos2 = jnp.argmax((input_ids == E2_ID).astype(jnp.int32), axis=1)
    ent1 = hidden[jnp.arange(B), pos1]
    ent2 = hidden[jnp.arange(B), pos2]
    x_ref = jnp.concatenate([ent1, ent2], axis=1)
    h_ref = jnp.maximum(x_ref @ params["w1"] + params["b1"], 0.0)
    logits_ref = h_ref @ params["w2"] + params["b2"]

    assert logits.shape == (B, NUM_LABELS)
    # Tolerance loosened for bf16 matmul operands (f32 accumulation).
    assert jnp.allclose(logits, logits_ref, atol=2e-2, rtol=2e-2)
    print("KERNEL_OK")
</pallas_src>

<mosaic_0001>
module attributes {stable_mosaic.version = 11 : i64} {
  func.func @_rel_head_kernel(%arg0: i32, %arg1: i32, %arg2: memref<8x128xbf16, #tpu.memory_space<vmem>>, %arg3: memref<128x128xbf16, #tpu.memory_space<vmem>>, %arg4: memref<1x128xf32, #tpu.memory_space<vmem>>, %arg5: memref<128x128xbf16, #tpu.memory_space<vmem>>, %arg6: memref<1x128xf32, #tpu.memory_space<vmem>>, %arg7: memref<8x128xf32, #tpu.memory_space<vmem>>, %arg8: memref<8x128xf32, #tpu.memory_space<vmem>>) attributes {dimension_semantics = [#tpu.dimension_semantics<parallel>, #tpu.dimension_semantics<arbitrary>], iteration_bounds = array<i64: 1, 1>, scalar_prefetch = 0 : i64, scratch_operands = 1 : i64, tpu.core_type = #tpu.core_type<tc>, window_params = [{transform_indices = @transform_0, window_bounds = array<i64: 8, 128>}, {transform_indices = @transform_1, window_bounds = array<i64: 128, 128>}, {transform_indices = @transform_2, window_bounds = array<i64: 1, 128>}, {transform_indices = @transform_3, window_bounds = array<i64: 128, 128>}, {pipeline_mode = #tpu.pipeline_mode<synchronous>, transform_indices = @transform_4, window_bounds = array<i64: 1, 128>}, {transform_indices = @transform_5, window_bounds = array<i64: 8, 128>}]} {
    %c0_i32 = arith.constant 0 : i32
    %0 = arith.cmpi eq, %arg1, %c0_i32 : i32
    %1 = arith.extui %0 : i1 to i32
    %c0_i32_0 = arith.constant 0 : i32
    %2 = arith.cmpi ne, %1, %c0_i32_0 : i32
    scf.if %2 {
      %cst_16 = arith.constant 0.000000e+00 : f32
      %20 = vector.broadcast %cst_16 : f32 to vector<8x128xf32>
      %c0_17 = arith.constant 0 : index
      %c0_18 = arith.constant 0 : index
      %21 = vector.load %arg8[%c0_17, %c0_18] : memref<8x128xf32, #tpu.memory_space<vmem>>, vector<8x128xf32>
      tpu.vector_store %arg8[%c0_17, %c0_18], %20 {strides = array<i32>} : memref<8x128xf32, #tpu.memory_space<vmem>>, vector<8x128xf32>,
    } else {
    }
    %c0 = arith.constant 0 : index
    %c0_1 = arith.constant 0 : index
    %3 = vector.load %arg2[%c0, %c0_1] : memref<8x128xbf16, #tpu.memory_space<vmem>>, vector<8x128xbf16>
    %c0_2 = arith.constant 0 : index
    %c0_3 = arith.constant 0 : index
    %4 = vector.load %arg3[%c0_2, %c0_3] : memref<128x128xbf16, #tpu.memory_space<vmem>>, vector<128x128xbf16>
    %cst = arith.constant dense<0.000000e+00> : vector<8x128xf32>
    %5 = tpu.matmul %3, %4, %cst {dimension_numbers = #tpu.dot_dimension_numbers<[1], [0], [0], [1], [0, 0, 1, 1], [], []>} : vector<8x128xbf16>, vector<128x128xbf16>, vector<8x128xf32> -> vector<8x128xf32>
    %c0_4 = arith.constant 0 : index
    %c0_5 = arith.constant 0 : index
    %6 = vector.load %arg4[%c0_4, %c0_5] : memref<1x128xf32, #tpu.memory_space<vmem>>, vector<1x128xf32>
    %7 = vector.broadcast %6 : vector<1x128xf32> to vector<8x128xf32>
    %8 = arith.addf %5, %7 : vector<8x128xf32>
    %cst_6 = arith.constant 0.000000e+00 : f32
    %9 = vector.broadcast %cst_6 : f32 to vector<8x128xf32>
    %10 = arith.maximumf %8, %9 : vector<8x128xf32>
    %c0_7 = arith.constant 0 : index
    %c0_8 = arith.constant 0 : index
    %11 = vector.load %arg8[%c0_7, %c0_8] : memref<8x128xf32, #tpu.memory_space<vmem>>, vector<8x128xf32>
    %12 = arith.truncf %10 : vector<8x128xf32> to vector<8x128xbf16>
    %c0_9 = arith.constant 0 : index
    %c0_10 = arith.constant 0 : index
    %13 = vector.load %arg5[%c0_9, %c0_10] : memref<128x128xbf16, #tpu.memory_space<vmem>>, vector<128x128xbf16>
    %cst_11 = arith.constant dense<0.000000e+00> : vector<8x128xf32>
    %14 = tpu.matmul %12, %13, %cst_11 {dimension_numbers = #tpu.dot_dimension_numbers<[1], [0], [0], [1], [0, 0, 1, 1], [], []>} : vector<8x128xbf16>, vector<128x128xbf16>, vector<8x128xf32> -> vector<8x128xf32>
    %15 = arith.addf %11, %14 : vector<8x128xf32>
    %c0_12 = arith.constant 0 : index
    %c0_13 = arith.constant 0 : index
    %16 = vector.load %arg8[%c0_12, %c0_13] : memref<8x128xf32, #tpu.memory_space<vmem>>, vector<8x128xf32>
    tpu.vector_store %arg8[%c0_12, %c0_13], %15 {strides = array<i32>} : memref<8x128xf32, #tpu.memory_space<vmem>>, vector<8x128xf32>,
    %c0_i32_14 = arith.constant 0 : i32
    %17 = arith.cmpi eq, %arg1, %c0_i32_14 : i32
    %18 = arith.extui %17 : i1 to i32
    %c0_i32_15 = arith.constant 0 : i32
    %19 = arith.cmpi ne, %18, %c0_i32_15 : i32
    scf.if %19 {
      %c0_16 = arith.constant 0 : index
      %c0_17 = arith.constant 0 : index
      %20 = vector.load %arg8[%c0_16, %c0_17] : memref<8x128xf32, #tpu.memory_space<vmem>>, vector<8x128xf32>
      %c0_18 = arith.constant 0 : index
      %c0_19 = arith.constant 0 : index
      %21 = vector.load %arg6[%c0_18, %c0_19] : memref<1x128xf32, #tpu.memory_space<vmem>>, vector<1x128xf32>
      %22 = vector.broadcast %21 : vector<1x128xf32> to vector<8x128xf32>
      %23 = arith.addf %20, %22 : vector<8x128xf32>
      %c0_20 = arith.constant 0 : index
      %c0_21 = arith.constant 0 : index
      %24 = vector.load %arg7[%c0_20, %c0_21] : memref<8x128xf32, #tpu.memory_space<vmem>>, vector<8x128xf32>
      tpu.vector_store %arg7[%c0_20, %c0_21], %23 {strides = array<i32>} : memref<8x128xf32, #tpu.memory_space<vmem>>, vector<8x128xf32>,
    } else {
    }
    return
  }
  func.func @transform_0(%arg0: i32, %arg1: i32) -> (i32, i32) {
    %c0_i32 = arith.constant 0 : i32
    %c0_i32_0 = arith.constant 0 : i32
    return %arg0, %c0_i32 : i32, i32
  }
  func.func @transform_1(%arg0: i32, %arg1: i32) -> (i32, i32) {
    %c0_i32 = arith.constant 0 : i32
    %c0_i32_0 = arith.constant 0 : i32
    return %c0_i32, %arg1 : i32, i32
  }
  func.func @transform_2(%arg0: i32, %arg1: i32) -> (i32, i32) {
    %c0_i32 = arith.constant 0 : i32
    %c0_i32_0 = arith.constant 0 : i32
    return %c0_i32, %arg1 : i32, i32
  }
  func.func @transform_3(%arg0: i32, %arg1: i32) -> (i32, i32) {
    %c0_i32 = arith.constant 0 : i32
    %c0_i32_0 = arith.constant 0 : i32
    return %arg1, %c0_i32 : i32, i32
  }
  func.func @transform_4(%arg0: i32, %arg1: i32) -> (i32, i32) {
    %c0_i32 = arith.constant 0 : i32
    %c0_i32_0 = arith.constant 0 : i32
    %c0_i32_1 = arith.constant 0 : i32
    return %c0_i32, %c0_i32_0 : i32, i32
  }
  func.func @transform_5(%arg0: i32, %arg1: i32) -> (i32, i32) {
    %c0_i32 = arith.constant 0 : i32
    %c0_i32_0 = arith.constant 0 : i32
    return %arg0, %c0_i32 : i32, i32
  }
}

</mosaic_0001>

<llo_original>
// kernel: tpu_custom_call.1
$region0: #{tpu_custom_call.1}
  #allocation0 [shape = 'u32[]', space=smem, size = 0x4, offset = 0x4, fixed_abs, tag = 'smem constant byte address 0x4 - core index']
  #allocation1 [shape = 'u32[144,128]{1,0:T(1,128)}', space=vmem, size = 0x12000, scoped, tag = 'internal scratch']
  #allocation2 [shape = 'f32[8,128]{1,0:T(8,128)}', space=vmem, size = 0x1000, scoped, tag = 'scratch operand']
  %s0 = inlined_call_operand.hbm [shape: bf16[8,128], index: 0, kind: input, shape index: {}]
  %s1 = inlined_call_operand.hbm [shape: bf16[128,128], index: 1, kind: input, shape index: {}]
  %s2 = inlined_call_operand.vmem [shape: f32[1,128], index: 2, kind: input, shape index: {}]
  %s3 = inlined_call_operand.hbm [shape: bf16[128,128], index: 3, kind: input, shape index: {}]
  %s4 = inlined_call_operand.vmem [shape: f32[1,128], index: 4, kind: input, shape index: {}]
  %s5 = inlined_call_operand.hbm [shape: f32[8,128], index: 5, kind: output, shape index: {}]
  %s6 = sld [smem:[#allocation0]]
  $region50: #{tpu_custom_call.1} parent=0
    _
  %s8 = ssub.s32 1, %s6
  %s9 = scalar_select 0, %s8, %s6
  $region1: #{tpu_custom_call.1} parent=0
    #allocation3 [shape = 'u8[2048]{0}', space=vmem, size = 0x800, scoped, tag = 'input window, operand 0, single buffered']
    #allocation4 [shape = 's32[1]{0}', space=sflag, size = 0x4, scoped, tag = 'scoped memory for tpu_custom_call.1']
    #allocation5 [shape = 's32[1]{0}', space=sflag, size = 0x4, scoped, tag = 'scoped memory for tpu_custom_call.1']
    #allocation6 [shape = 'u8[32768]{0}', space=vmem, size = 0x8000, scoped, tag = 'input window, operand 1, single buffered']
    #allocation7 [shape = 's32[1]{0}', space=sflag, size = 0x4, scoped, tag = 'scoped memory for tpu_custom_call.1']
    #allocation8 [shape = 'u8[32768]{0}', space=vmem, size = 0x8000, scoped, tag = 'input window, operand 3, single buffered']
    #allocation9 [shape = 'u8[4096]{0}', space=vmem, size = 0x1000, scoped, tag = 'output window, operand 0, single buffered']
    %10 = vsyncpa [#allocation4], 0
    %11 = vsyncpa [#allocation7], 0
    %12 = vsyncpa [#allocation5], 0
    // Predicated region
    $region2: #{tpu_custom_call.1} parent=1 // pred_check
      _
    $region3: #{tpu_custom_call.1} parent=1 // pred_check_branch
      %14 = sbr.rel (0) target = $region5
    $region4: #{tpu_custom_call.1} parent=1 // pred_region
      %s16 = ssub.s32 64, 64
      %17 = vsyncadd [#allocation4], %s16
      %s19 = sshll.u32 [#allocation3], 4
      %s20 = int_to_ptr.vmem [resolvable:$true] %s19
      %22 = dma.hbm_to_vmem [thread:$0]  %s0, 64, %s20, [#allocation4]
    $region5: #{tpu_custom_call.1} parent=1 // pred_fallthru
      _
    // Predicated region
    $region6: #{tpu_custom_call.1} parent=1 // pred_check
      _
    $region7: #{tpu_custom_call.1} parent=1 // pred_check_branch
      %24 = sbr.rel (0) target = $region9
    $region8: #{tpu_custom_call.1} parent=1 // pred_region
      %s26 = ssub.s32 1024, 1024
      %27 = vsyncadd [#allocation7], %s26
      %s28 = sshll.u32 [#allocation6], 4
      %s29 = int_to_ptr.vmem [resolvable:$true] %s28
      %34 = dma.hbm_to_vmem [thread:$0]  %s1, 1024, %s29, [#allocation7], 64, 64, 4
    $region9: #{tpu_custom_call.1} parent=1 // pred_fallthru
      _
    // Predicated region
    $region10: #{tpu_custom_call.1} parent=1 // pred_check
      _
    $region11: #{tpu_custom_call.1} parent=1 // pred_check_branch
      %36 = sbr.rel (0) target = $region13
    $region12: #{tpu_custom_call.1} parent=1 // pred_region
      _
    $region13: #{tpu_custom_call.1} parent=1 // pred_fallthru
      _
    // Predicated region
    $region14: #{tpu_custom_call.1} parent=1 // pred_check
      _
    $region15: #{tpu_custom_call.1} parent=1 // pred_check_branch
      %38 = sbr.rel (0) target = $region17
    $region16: #{tpu_custom_call.1} parent=1 // pred_region
      %s40 = ssub.s32 1024, 1024
      %41 = vsyncadd [#allocation7], %s40
      %s42 = sshll.u32 [#allocation8], 4
      %s43 = int_to_ptr.vmem [resolvable:$true] %s42
      %48 = dma.hbm_to_vmem [thread:$0]  %s3, 1024, %s43, [#allocation7], 64, 64, 4
    $region17: #{tpu_custom_call.1} parent=1 // pred_fallthru
      _
    // Predicated region
    $region18: #{tpu_custom_call.1} parent=1 // pred_check
      _
    $region19: #{tpu_custom_call.1} parent=1 // pred_check_branch
      %50 = sbr.rel (0) target = $region21
    $region20: #{tpu_custom_call.1} parent=1 // pred_region
      _
    $region21: #{tpu_custom_call.1} parent=1 // pred_fallthru
      _
    // Predicated region
    $region22: #{tpu_custom_call.1} parent=1 // pred_check
      _
    $region23: #{tpu_custom_call.1} parent=1 // pred_check_branch
      %52 = sbr.rel (0) target = $region25
    $region24: #{tpu_custom_call.1} parent=1 // pred_region
      %53 = dma.done [#allocation4], 64
    $region25: #{tpu_custom_call.1} parent=1 // pred_fallthru
      _
    // Predicated region
    $region26: #{tpu_custom_call.1} parent=1 // pred_check
      _
    $region27: #{tpu_custom_call.1} parent=1 // pred_check_branch
      %55 = sbr.rel (0) target = $region29
    $region28: #{tpu_custom_call.1} parent=1 // pred_region
      %56 = dma.done [#allocation7], 1024
    $region29: #{tpu_custom_call.1} parent=1 // pred_fallthru
      _
    // Predicated region
    $region30: #{tpu_custom_call.1} parent=1 // pred_check
      _
    $region31: #{tpu_custom_call.1} parent=1 // pred_check_branch
      %58 = sbr.rel (0) target = $region33
    $region32: #{tpu_custom_call.1} parent=1 // pred_region
      %59 = dma.done [#allocation7], 1024
    $region33: #{tpu_custom_call.1} parent=1 // pred_fallthru
      _
    %p61 = scmp.eq.s32.totalorder 0, 0
    // Predicated region
    $region34: #{tpu_custom_call.1} parent=1 // pred_check
      %p62 = pneg %p61
    $region35: #{tpu_custom_call.1} parent=1 // pred_check_branch
      %64 = sbr.rel (%p62) target = $region37
    $region36: #{tpu_custom_call.1} parent=1 // pred_region
      %65 = vst [vmem:[#allocation2] sm:$0xff] 0.0
    $region37: #{tpu_custom_call.1} parent=1 // pred_fallthru
      _
    %v66 = vld [vmem:[#allocation3] sm:$0xf]
    %v67 = vld [vmem:[#allocation6] sm:$0xf]
    %v68 = vld [vmem:[#allocation6 + $0x4] sm:$0xf]
    %v69 = vld [vmem:[#allocation6 + $0x8] sm:$0xf]
    %v70 = vld [vmem:[#allocation6 + $0xc] sm:$0xf]
    %v71 = vld [vmem:[#allocation6 + $0x10] sm:$0xf]
    %v72 = vld [vmem:[#allocation6 + $0x14] sm:$0xf]
    %v73 = vld [vmem:[#allocation6 + $0x18] sm:$0xf]
    %v74 = vld [vmem:[#allocation6 + $0x1c] sm:$0xf]
    %v75 = vld [vmem:[#allocation6 + $0x20] sm:$0xf]
    %v76 = vld [vmem:[#allocation6 + $0x24] sm:$0xf]
    %v77 = vld [vmem:[#allocation6 + $0x28] sm:$0xf]
    %v78 = vld [vmem:[#allocation6 + $0x2c] sm:$0xf]
    %v79 = vld [vmem:[#allocation6 + $0x30] sm:$0xf]
    %v80 = vld [vmem:[#allocation6 + $0x34] sm:$0xf]
    %v81 = vld [vmem:[#allocation6 + $0x38] sm:$0xf]
    %v82 = vld [vmem:[#allocation6 + $0x3c] sm:$0xf]
    %v83 = vld [vmem:[%s2] sm:$0x1]
    %v85 = vlaneseq
    %v86 = vshrl.u32 %v85, 7
    %v87 = vsub.s32 0, %v86
    %v88 = vrot.slane %v83, %v87
    %v106 = vunpack.c.l.b16 %v67
    %v107 = vunpack.c.l.b16 %v68
    %v108 = vunpack.c.l.b16 %v69
    %v109 = vunpack.c.l.b16 %v70
    %v110 = vunpack.c.l.b16 %v71
    %v111 = vunpack.c.l.b16 %v72
    %v112 = vunpack.c.l.b16 %v73
    %v113 = vunpack.c.l.b16 %v74
    %v114 = vunpack.c.l.b16 %v75
    %v115 = vunpack.c.l.b16 %v76
    %v116 = vunpack.c.l.b16 %v77
    %v117 = vunpack.c.l.b16 %v78
    %v118 = vunpack.c.l.b16 %v79
    %v119 = vunpack.c.l.b16 %v80
    %v120 = vunpack.c.l.b16 %v81
    %v121 = vunpack.c.l.b16 %v82
    %v122 = vpack.c.b16 %v107, %v106
    %v123 = vpack.c.b16 %v109, %v108
    %v124 = vpack.c.b16 %v111, %v110
    %v125 = vpack.c.b16 %v113, %v112
    %v126 = vpack.c.b16 %v115, %v114
    %v127 = vpack.c.b16 %v117, %v116
    %v128 = vpack.c.b16 %v119, %v118
    %v129 = vpack.c.b16 %v121, %v120
    %138 = vmatprep.subr.bf16.mxu0 0
    %139 = vmatpush1.bf16.msra.mxu0 %v122
    %140 = vmatprep.subr.bf16.mxu0 0
    %141 = vmatpush1.bf16.msra.mxu0 %v123
    %142 = vmatprep.subr.bf16.mxu0 0
    %143 = vmatpush1.bf16.msra.mxu0 %v124
    %144 = vmatprep.subr.bf16.mxu0 0
    %145 = vmatpush1.bf16.msra.mxu0 %v125
    %146 = vmatprep.subr.bf16.mxu0 0
    %147 = vmatpush1.bf16.msra.mxu0 %v126
    %148 = vmatprep.subr.bf16.mxu0 0
    %149 = vmatpush1.bf16.msra.mxu0 %v127
    %150 = vmatprep.subr.bf16.mxu0 0
    %151 = vmatpush1.bf16.msra.mxu0 %v128
    %152 = vmatprep.subr.bf16.mxu0 0
    %153 = vmatpush1.bf16.msra.mxu0 %v129
    %154 = vmatprep.subr.bf16.mxu0 0
    %155 = vmatpush1.bf16.msra.mxu0 0
    %156 = vmatprep.subr.bf16.mxu0 0
    %157 = vmatpush1.bf16.msra.mxu0 0
    %158 = vmatprep.subr.bf16.mxu0 0
    %159 = vmatpush1.bf16.msra.mxu0 0
    %160 = vmatprep.subr.bf16.mxu0 0
    %161 = vmatpush1.bf16.msra.mxu0 0
    %162 = vmatprep.subr.bf16.mxu0 0
    %163 = vmatpush1.bf16.msra.mxu0 0
    %164 = vmatprep.subr.bf16.mxu0 0
    %165 = vmatpush1.bf16.msra.mxu0 0
    %166 = vmatprep.subr.bf16.mxu0 0
    %167 = vmatpush1.bf16.msra.mxu0 0
    %168 = vmatprep.subr.bf16.mxu0 0
    %169 = vmatpush1.bf16.msra.mxu0 0
    %170 = vmatprep.mubr.bf16.mxu0 0
    %171 = vmatmul.mubr.bf16.gmra.mrb[0].mxu0 %v66
    %v172 = vpop.f32.mrb[0].mxu0
    %v173 = vadd.f32 %v88, %v172
    %v174 = vpop.f32.mrb[0].mxu0
    %v175 = vpop.f32.mrb[0].mxu0
    %v176 = vpop.f32.mrb[0].mxu0
    %177 = vdwg.mxu0
    %v178 = vmax.f32 %v173, 0.0
    %v179 = vld [vmem:[#allocation2] sm:$0xff]
    %v180 = vpack.c.bf16 %v178, %v178
    %v181 = vld [vmem:[#allocation8] sm:$0xf]
    %v182 = vld [vmem:[#allocation8 + $0x4] sm:$0xf]
    %v183 = vld [vmem:[#allocation8 + $0x8] sm:$0xf]
    %v184 = vld [vmem:[#allocation8 + $0xc] sm:$0xf]
    %v185 = vld [vmem:[#allocation8 + $0x10] sm:$0xf]
    %v186 = vld [vmem:[#allocation8 + $0x14] sm:$0xf]
    %v187 = vld [vmem:[#allocation8 + $0x18] sm:$0xf]
    %v188 = vld [vmem:[#allocation8 + $0x1c] sm:$0xf]
    %v189 = vld [vmem:[#allocation8 + $0x20] sm:$0xf]
    %v190 = vld [vmem:[#allocation8 + $0x24] sm:$0xf]
    %v191 = vld [vmem:[#allocation8 + $0x28] sm:$0xf]
    %v192 = vld [vmem:[#allocation8 + $0x2c] sm:$0xf]
    %v193 = vld [vmem:[#allocation8 + $0x30] sm:$0xf]
    %v194 = vld [vmem:[#allocation8 + $0x34] sm:$0xf]
    %v195 = vld [vmem:[#allocation8 + $0x38] sm:$0xf]
    %v196 = vld [vmem:[#allocation8 + $0x3c] sm:$0xf]
    %v213 = vunpack.c.l.b16 %v181
    %v214 = vunpack.c.l.b16 %v182
    %v215 = vunpack.c.l.b16 %v183
    %v216 = vunpack.c.l.b16 %v184
    %v217 = vunpack.c.l.b16 %v185
    %v218 = vunpack.c.l.b16 %v186
    %v219 = vunpack.c.l.b16 %v187
    %v220 = vunpack.c.l.b16 %v188
    %v221 = vunpack.c.l.b16 %v189
    %v222 = vunpack.c.l.b16 %v190
    %v223 = vunpack.c.l.b16 %v191
    %v224 = vunpack.c.l.b16 %v192
    %v225 = vunpack.c.l.b16 %v193
    %v226 = vunpack.c.l.b16 %v194
    %v227 = vunpack.c.l.b16 %v195
    %v228 = vunpack.c.l.b16 %v196
    %v229 = vpack.c.b16 %v214, %v213
    %v230 = vpack.c.b16 %v216, %v215
    %v231 = vpack.c.b16 %v218, %v217
    %v232 = vpack.c.b16 %v220, %v219
    %v233 = vpack.c.b16 %v222, %v221
    %v234 = vpack.c.b16 %v224, %v223
    %v235 = vpack.c.b16 %v226, %v225
    %v236 = vpack.c.b16 %v228, %v227
    %245 = vmatprep.subr.bf16.mxu0 0
    %246 = vmatpush1.bf16.msra.mxu0 %v229
    %247 = vmatprep.subr.bf16.mxu0 0
    %248 = vmatpush1.bf16.msra.mxu0 %v230
    %249 = vmatprep.subr.bf16.mxu0 0
    %250 = vmatpush1.bf16.msra.mxu0 %v231
    %251 = vmatprep.subr.bf16.mxu0 0
    %252 = vmatpush1.bf16.msra.mxu0 %v232
    %253 = vmatprep.subr.bf16.mxu0 0
    %254 = vmatpush1.bf16.msra.mxu0 %v233
    %255 = vmatprep.subr.bf16.mxu0 0
    %256 = vmatpush1.bf16.msra.mxu0 %v234
    %257 = vmatprep.subr.bf16.mxu0 0
    %258 = vmatpush1.bf16.msra.mxu0 %v235
    %259 = vmatprep.subr.bf16.mxu0 0
    %260 = vmatpush1.bf16.msra.mxu0 %v236
    %261 = vmatprep.subr.bf16.mxu0 0
    %262 = vmatpush1.bf16.msra.mxu0 0
    %263 = vmatprep.subr.bf16.mxu0 0
    %264 = vmatpush1.bf16.msra.mxu0 0
    %265 = vmatprep.subr.bf16.mxu0 0
    %266 = vmatpush1.bf16.msra.mxu0 0
    %267 = vmatprep.subr.bf16.mxu0 0
    %268 = vmatpush1.bf16.msra.mxu0 0
    %269 = vmatprep.subr.bf16.mxu0 0
    %270 = vmatpush1.bf16.msra.mxu0 0
    %271 = vmatprep.subr.bf16.mxu0 0
    %272 = vmatpush1.bf16.msra.mxu0 0
    %273 = vmatprep.subr.bf16.mxu0 0
    %274 = vmatpush1.bf16.msra.mxu0 0
    %275 = vmatprep.subr.bf16.mxu0 0
    %276 = vmatpush1.bf16.msra.mxu0 0
    %277 = vmatprep.mubr.bf16.mxu0 0
    %278 = vmatmul.mubr.bf16.gmra.mrb[0].mxu0 %v180
    %v279 = vpop.f32.mrb[0].mxu0
    %v280 = vadd.f32 0.0, %v279
    %v281 = vpop.f32.mrb[0].mxu0
    %v282 = vpop.f32.mrb[0].mxu0
    %v283 = vpop.f32.mrb[0].mxu0
    %284 = vdwg.mxu0
    %v285 = vadd.f32 %v179, %v280
    %286 = vst [vmem:[#allocation2] sm:$0xff] %v285
    // Predicated region
    $region38: #{tpu_custom_call.1} parent=1 // pred_check
      %p287 = pneg %p61
    $region39: #{tpu_custom_call.1} parent=1 // pred_check_branch
      %289 = sbr.rel (%p287) target = $region41
    $region40: #{tpu_custom_call.1} parent=1 // pred_region
      %v290 = vld [vmem:[#allocation2] sm:$0xff]
      %v291 = vld [vmem:[%s4] sm:$0x1]
      %v293 = vlaneseq
      %v294 = vshrl.u32 %v293, 7
      %v295 = vsub.s32 0, %v294
      %v296 = vrot.slane %v291, %v295
      %v298 = vadd.f32 %v290, %v296
      %299 = vst [vmem:[#allocation9] sm:$0xff] %v298
    $region41: #{tpu_custom_call.1} parent=1 // pred_fallthru
      _
    // Predicated region
    $region42: #{tpu_custom_call.1} parent=1 // pred_check
      _
    $region43: #{tpu_custom_call.1} parent=1 // pred_check_branch
      %301 = sbr.rel (0) target = $region45
    $region44: #{tpu_custom_call.1} parent=1 // pred_region
      %s303 = ssub.s32 128, 128
      %304 = vsyncadd [#allocation5], %s303
      %s306 = sshll.u32 [#allocation9], 4
      %s307 = int_to_ptr.vmem [resolvable:$true] %s306
      %309 = dma.vmem_to_hbm [thread:$0]  %s307, 128, %s5, [#allocation5]
    $region45: #{tpu_custom_call.1} parent=1 // pred_fallthru
      _
    // Predicated region
    $region46: #{tpu_custom_call.1} parent=1 // pred_check
      _
    $region47: #{tpu_custom_call.1} parent=1 // pred_check_branch
      %311 = sbr.rel (0) target = $region49
    $region48: #{tpu_custom_call.1} parent=1 // pred_region
      %312 = dma.done [#allocation5], 128
    $region49: #{tpu_custom_call.1} parent=1 // pred_fallthru
      _
    %313 = vsyncpa [#allocation4], 1
    %314 = vsyncpa [#allocation7], 1
    %315 = vsyncpa [#allocation5], 1

</llo_original>
